<compile_context>
chip_gen: v7x
topology: tpu7x:2x2x1
jax: 0.10.0
libtpu: 0.0.40
codegen_flags: <defaults>
</compile_context>

<pallas_src>
import jax
import jax.numpy as jnp
from jax.experimental import pallas as pl
from jax.experimental.pallas import tpu as pltpu


def _round_up(n, m):
    return ((n + m - 1) // m) * m


def _choose_pack(latent_dim, max_pack=16):
    """Choose samples-per-row `pack` and padded latent width so pack*L_pad is
    lane-dense (multiple of 128) for the output stream.  pack is capped so the
    block-diagonal weight expansion (O(pack^2)) stays tiny."""
    if latent_dim >= 128:
        return 1, _round_up(latent_dim, 128)
    l_pad = 1
    while l_pad < latent_dim:
        l_pad *= 2                      # next power of two (a divisor of 128)
    pack = min(128 // l_pad, max_pack)
    return pack, l_pad


def _block_diag(w, pack):
    """Block-diagonal expansion: (din, dout) -> (pack*din, pack*dout)."""
    if pack == 1:
        return w
    din, dout = w.shape
    big = jnp.zeros((pack, din, pack, dout), w.dtype)
    idx = jnp.arange(pack)
    big = big.at[idx, :, idx, :].set(w)          # diagonal blocks = w
    return big.reshape(pack * din, pack * dout)


def _make_kernel(mxu_dtype):
    def kernel(x_ref, w1_ref, b1_ref, w2_ref, b2_ref, out_ref):
        # Layer 1: Linear + ReLU.  MXU operands in mxu_dtype (bf16 by default),
        # f32 accumulation, f32 bias/activation (v5e EUP/VPU have no bf16).
        x = x_ref[...].astype(mxu_dtype)
        h = jnp.dot(x, w1_ref[...], preferred_element_type=jnp.float32)
        h = jnp.maximum(h + b1_ref[...], 0.0)

        # Layer 2: Linear + Sigmoid.  Same MXU dtype, f32 accumulation/activation.
        z = jnp.dot(h.astype(mxu_dtype), w2_ref[...],
                    preferred_element_type=jnp.float32)
        z = jax.nn.sigmoid(z + b2_ref[...])

        out_ref[...] = z.astype(out_ref.dtype)
    return kernel


def make_latent_explanation_predictor(w1, b1, w2, b2, *,
                                      block_rows=4096,
                                      out_dtype=jnp.float32,
                                      mxu_dtype=jnp.bfloat16,
                                      vmem_limit_bytes=None):
    """Build a jitted forward(x): [B, D] -> [B, L] (sigmoid latent codes).

    block_rows: packed-row batch tile (multiple of 8).  4096 packed rows
      (= 16384 samples at pack=4) keeps live VMEM ~16 MiB in f32 -> safe on
      v7x's 32 MiB scoped default; use 8192-16384 (+ vmem_limit_bytes) on
      v5e/v6e to amortize per-step overhead further.
    out_dtype: dtype stored to HBM (bf16 cuts store traffic ~2x, outputs are
      in [0,1] so the precision loss is ~1e-3).
    mxu_dtype: dtype of the matmul operands (bf16 default; f32 for an exact
      match to the f32 reference, slower on v5e).
    """
    w1 = jnp.asarray(w1)
    w2 = jnp.asarray(w2)
    D, H = w1.shape
    L = w2.shape[1]
    b1 = jnp.asarray(b1).reshape(1, H)
    b2 = jnp.asarray(b2).reshape(1, L)

    pack, l_pad = _choose_pack(L)
    if l_pad != L:                       # zero output columns, stripped on unpack
        w2 = jnp.pad(w2, ((0, 0), (0, l_pad - L)))
        b2 = jnp.pad(b2, ((0, 0), (0, l_pad - L)))

    # Packed weights / biases: built exactly once (hoisted out of the call path).
    w1_big = _block_diag(w1, pack).astype(mxu_dtype)
    w2_big = _block_diag(w2, pack).astype(mxu_dtype)
    b1_big = jnp.tile(b1, (1, pack)).astype(jnp.float32)
    b2_big = jnp.tile(b2, (1, pack)).astype(jnp.float32)

    Dp, Hp, Lp = pack * D, pack * H, pack * l_pad
    kernel = _make_kernel(mxu_dtype)
    weight_bytes = (w1_big.size + w2_big.size) * jnp.dtype(mxu_dtype).itemsize \
                   + (b1_big.size + b2_big.size) * 4

    cp_kwargs = dict(dimension_semantics=("parallel",))
    if vmem_limit_bytes is not None:
        cp_kwargs["vmem_limit_bytes"] = int(vmem_limit_bytes)

    @jax.jit
    def forward(x):
        B = x.shape[0]

        # Pad only to a multiple of pack*8 samples (<= pack*8-1 rows of zeros),
        # NOT to a multiple of the tile -- the ragged last grid block is
        # handled by Pallas with a masked writeback.
        b_pad = _round_up(B, pack * 8)
        x_p = x if b_pad == B else jnp.pad(x, ((0, b_pad - B), (0, 0)))
        rows = b_pad // pack
        x_p = x_p.reshape(rows, Dp)      # row-major fold: free reshape

        # Batch tile: as large as block_rows allows, but never a single grid
        # step for large batches (keeps v7x's second TensorCore busy).
        tb = min(block_rows, rows)
        if rows >= 16:
            tb = min(tb, _round_up(pl.cdiv(rows, 2), 8))
        tb = _round_up(tb, 8)
        grid = (pl.cdiv(rows, tb),)

        out = pl.pallas_call(
            kernel,
            out_shape=jax.ShapeDtypeStruct((rows, Lp), out_dtype),
            grid_spec=pl.GridSpec(
                grid=grid,
                in_specs=[
                    pl.BlockSpec((tb, Dp), lambda i: (i, 0)),   # streamed activations
                    pl.BlockSpec((Dp, Hp), lambda i: (0, 0)),   # VMEM-resident weights
                    pl.BlockSpec((1, Hp), lambda i: (0, 0)),
                    pl.BlockSpec((Hp, Lp), lambda i: (0, 0)),
                    pl.BlockSpec((1, Lp), lambda i: (0, 0)),
                ],
                out_specs=pl.BlockSpec((tb, Lp), lambda i: (i, 0)),
            ),
            compiler_params=pltpu.CompilerParams(**cp_kwargs),
            cost_estimate=pl.CostEstimate(
                flops=2 * B * (D * H + H * L),
                transcendentals=B * L,
                bytes_accessed=B * D * x.dtype.itemsize
                               + B * L * jnp.dtype(out_dtype).itemsize
                               + weight_bytes,
            ),
        )(x_p, w1_big, b1_big, w2_big, b2_big)

        # Unpack lane-dense output, strip batch padding and padded latent cols.
        return out.reshape(rows * pack, l_pad)[:B, :L]

    return forward


def init_params(key, input_dim, latent_dim=32, hidden=64):
    """Deterministic synthetic params (PyTorch-like uniform fan-in init)."""
    k1, k2, k3, k4 = jax.random.split(key, 4)
    bound1 = 1.0 / jnp.sqrt(input_dim)
    bound2 = 1.0 / jnp.sqrt(hidden)
    w1 = jax.random.uniform(k1, (input_dim, hidden), jnp.float32, -bound1, bound1)
    b1 = jax.random.uniform(k2, (1, hidden), jnp.float32, -bound1, bound1)
    w2 = jax.random.uniform(k3, (hidden, latent_dim), jnp.float32, -bound2, bound2)
    b2 = jax.random.uniform(k4, (1, latent_dim), jnp.float32, -bound2, bound2)
    return w1, b1, w2, b2


def _reference(x, w1, b1, w2, b2):
    h = jnp.maximum(x @ w1 + b1, 0.0)
    return jax.nn.sigmoid(h @ w2 + b2)


if __name__ == "__main__":
    key = jax.random.PRNGKey(0)
    k_x, k_p, k_x2, k_x3, k_p2 = jax.random.split(key, 5)

    input_dim, latent_dim = 32, 32
    w1, b1, w2, b2 = init_params(k_p, input_dim, latent_dim)

    # 1) Exact-semantics check (f32 MXU), tiny batch -> single grid step.
    fwd_exact = make_latent_explanation_predictor(w1, b1, w2, b2,
                                                  mxu_dtype=jnp.float32)
    batch = 8
    x = jax.random.normal(k_x, (batch, input_dim), jnp.float32)
    out = jax.block_until_ready(fwd_exact(x))
    ref = _reference(x, w1, b1, w2, b2)
    assert out.shape == (batch, latent_dim)
    assert jnp.allclose(out, ref, atol=1e-4, rtol=1e-4)

    # 2) Default path (bf16 MXU operands, f32 accumulation/IO), batch split
    #    across >=2 grid steps (megacore-friendly).
    fwd = make_latent_explanation_predictor(w1, b1, w2, b2)
    batch2 = 1000
    x2 = jax.random.normal(k_x2, (batch2, input_dim), jnp.float32)
    out2 = jax.block_until_ready(fwd(x2))
    ref2 = _reference(x2, w1, b1, w2, b2)
    assert out2.shape == (batch2, latent_dim)
    assert jnp.allclose(out2, ref2, atol=2e-2)

    # 3) Ragged last grid block (rows not a multiple of the tile) with a small
    #    tile -> exercises pipelined multi-step grid + masked tail writeback.
    fwd_small_tile = make_latent_explanation_predictor(w1, b1, w2, b2,
                                                       block_rows=64)
    batch3 = 777
    x3 = jax.random.normal(k_x3, (batch3, input_dim), jnp.float32)
    out3 = jax.block_until_ready(fwd_small_tile(x3))
    ref3 = _reference(x3, w1, b1, w2, b2)
    assert out3.shape == (batch3, latent_dim)
    assert jnp.allclose(out3, ref3, atol=2e-2)

    # 4) Narrow (bf16) output store: halves store-side HBM bytes.
    fwd_bf16_out = make_latent_explanation_predictor(w1, b1, w2, b2,
                                                     out_dtype=jnp.bfloat16)
    out4 = jax.block_until_ready(fwd_bf16_out(x2))
    assert out4.shape == (batch2, latent_dim)
    assert out4.dtype == jnp.bfloat16
    assert jnp.allclose(out4.astype(jnp.float32), ref2, atol=3e-2)

    # 5) latent_dim that does not divide 128 -> padded-column lane-dense path.
    lat5 = 24
    w1b, b1b, w2b, b2b = init_params(k_p2, input_dim, lat5)
    fwd5 = make_latent_explanation_predictor(w1b, b1b, w2b, b2b)
    out5 = jax.block_until_ready(fwd5(x))
    ref5 = _reference(x, w1b, b1b, w2b, b2b)
    assert out5.shape == (batch, lat5)
    assert jnp.allclose(out5, ref5, atol=2e-2)

    print("KERNEL_OK")
</pallas_src>

<mosaic_0001>
module attributes {stable_mosaic.version = 11 : i64} {
  func.func @kernel(%arg0: i32, %arg1: memref<8x128xf32, #tpu.memory_space<vmem>>, %arg2: memref<128x256xf32, #tpu.memory_space<vmem>>, %arg3: memref<1x256xf32, #tpu.memory_space<vmem>>, %arg4: memref<256x128xf32, #tpu.memory_space<vmem>>, %arg5: memref<1x128xf32, #tpu.memory_space<vmem>>, %arg6: memref<8x128xf32, #tpu.memory_space<vmem>>) attributes {dimension_semantics = [#tpu.dimension_semantics<parallel>], iteration_bounds = array<i64: 1>, scalar_prefetch = 0 : i64, scratch_operands = 0 : i64, tpu.core_type = #tpu.core_type<tc>, window_params = [{transform_indices = @transform_0, window_bounds = array<i64: 8, 128>}, {pipeline_mode = #tpu.pipeline_mode<synchronous>, transform_indices = @transform_1, window_bounds = array<i64: 128, 256>}, {pipeline_mode = #tpu.pipeline_mode<synchronous>, transform_indices = @transform_2, window_bounds = array<i64: 1, 256>}, {pipeline_mode = #tpu.pipeline_mode<synchronous>, transform_indices = @transform_3, window_bounds = array<i64: 256, 128>}, {pipeline_mode = #tpu.pipeline_mode<synchronous>, transform_indices = @transform_4, window_bounds = array<i64: 1, 128>}, {transform_indices = @transform_5, window_bounds = array<i64: 8, 128>}]} {
    %c0 = arith.constant 0 : index
    %c0_0 = arith.constant 0 : index
    %0 = vector.load %arg1[%c0, %c0_0] : memref<8x128xf32, #tpu.memory_space<vmem>>, vector<8x128xf32>
    %c0_1 = arith.constant 0 : index
    %c0_2 = arith.constant 0 : index
    %1 = vector.load %arg2[%c0_1, %c0_2] : memref<128x256xf32, #tpu.memory_space<vmem>>, vector<128x256xf32>
    %cst = arith.constant dense<0.000000e+00> : vector<8x256xf32>
    %2 = tpu.matmul %0, %1, %cst {dimension_numbers = #tpu.dot_dimension_numbers<[1], [0], [0], [1], [0, 0, 1, 1], [], []>} : vector<8x128xf32>, vector<128x256xf32>, vector<8x256xf32> -> vector<8x256xf32>
    %c0_3 = arith.constant 0 : index
    %c0_4 = arith.constant 0 : index
    %3 = vector.load %arg3[%c0_3, %c0_4] : memref<1x256xf32, #tpu.memory_space<vmem>>, vector<1x256xf32>
    %4 = vector.broadcast %3 : vector<1x256xf32> to vector<8x256xf32>
    %5 = arith.addf %2, %4 : vector<8x256xf32>
    %cst_5 = arith.constant 0.000000e+00 : f32
    %6 = vector.broadcast %cst_5 : f32 to vector<8x256xf32>
    %7 = arith.maximumf %5, %6 : vector<8x256xf32>
    %c0_6 = arith.constant 0 : index
    %c0_7 = arith.constant 0 : index
    %8 = vector.load %arg4[%c0_6, %c0_7] : memref<256x128xf32, #tpu.memory_space<vmem>>, vector<256x128xf32>
    %cst_8 = arith.constant dense<0.000000e+00> : vector<8x128xf32>
    %9 = tpu.matmul %7, %8, %cst_8 {dimension_numbers = #tpu.dot_dimension_numbers<[1], [0], [0], [1], [0, 0, 1, 1], [], []>} : vector<8x256xf32>, vector<256x128xf32>, vector<8x128xf32> -> vector<8x128xf32>
    %c0_9 = arith.constant 0 : index
    %c0_10 = arith.constant 0 : index
    %10 = vector.load %arg5[%c0_9, %c0_10] : memref<1x128xf32, #tpu.memory_space<vmem>>, vector<1x128xf32>
    %11 = vector.broadcast %10 : vector<1x128xf32> to vector<8x128xf32>
    %12 = arith.addf %9, %11 : vector<8x128xf32>
    %13 = arith.negf %12 : vector<8x128xf32>
    %14 = math.exp %13 : vector<8x128xf32>
    %cst_11 = arith.constant 1.000000e+00 : f32
    %15 = vector.broadcast %cst_11 : f32 to vector<8x128xf32>
    %16 = arith.addf %15, %14 : vector<8x128xf32>
    %17 = arith.divf %15, %16 : vector<8x128xf32>
    %c0_12 = arith.constant 0 : index
    %c0_13 = arith.constant 0 : index
    %18 = vector.load %arg6[%c0_12, %c0_13] : memref<8x128xf32, #tpu.memory_space<vmem>>, vector<8x128xf32>
    tpu.vector_store %arg6[%c0_12, %c0_13], %17 {strides = array<i32>} : memref<8x128xf32, #tpu.memory_space<vmem>>, vector<8x128xf32>,
    return
  }
  func.func @transform_0(%arg0: i32) -> (i32, i32) {
    %c0_i32 = arith.constant 0 : i32
    %c0_i32_0 = arith.constant 0 : i32
    return %arg0, %c0_i32 : i32, i32
  }
  func.func @transform_1(%arg0: i32) -> (i32, i32) {
    %c0_i32 = arith.constant 0 : i32
    %c0_i32_0 = arith.constant 0 : i32
    %c0_i32_1 = arith.constant 0 : i32
    return %c0_i32, %c0_i32_0 : i32, i32
  }
  func.func @transform_2(%arg0: i32) -> (i32, i32) {
    %c0_i32 = arith.constant 0 : i32
    %c0_i32_0 = arith.constant 0 : i32
    %c0_i32_1 = arith.constant 0 : i32
    return %c0_i32, %c0_i32_0 : i32, i32
  }
  func.func @transform_3(%arg0: i32) -> (i32, i32) {
    %c0_i32 = arith.constant 0 : i32
    %c0_i32_0 = arith.constant 0 : i32
    %c0_i32_1 = arith.constant 0 : i32
    return %c0_i32, %c0_i32_0 : i32, i32
  }
  func.func @transform_4(%arg0: i32) -> (i32, i32) {
    %c0_i32 = arith.constant 0 : i32
    %c0_i32_0 = arith.constant 0 : i32
    %c0_i32_1 = arith.constant 0 : i32
    return %c0_i32, %c0_i32_0 : i32, i32
  }
  func.func @transform_5(%arg0: i32) -> (i32, i32) {
    %c0_i32 = arith.constant 0 : i32
    %c0_i32_0 = arith.constant 0 : i32
    return %arg0, %c0_i32 : i32, i32
  }
}

</mosaic_0001>

<llo_original>
// kernel: forward.1
$region0: #{forward.1}
  #allocation0 [shape = 'u32[]', space=smem, size = 0x4, offset = 0x4, fixed_abs, tag = 'smem constant byte address 0x4 - core index']
  #allocation1 [shape = 'u32[144,128]{1,0:T(1,128)}', space=vmem, size = 0x12000, scoped, tag = 'internal scratch']
  %s0 = inlined_call_operand.vmem [shape: f32[8,128], index: 0, kind: input, shape index: {}]
  %s1 = inlined_call_operand.hbm [shape: f32[128,256], index: 1, kind: input, shape index: {}]
  %s2 = inlined_call_operand.vmem [shape: f32[1,256], index: 2, kind: input, shape index: {}]
  %s3 = inlined_call_operand.hbm [shape: f32[256,128], index: 3, kind: input, shape index: {}]
  %s4 = inlined_call_operand.vmem [shape: f32[1,128], index: 4, kind: input, shape index: {}]
  %s5 = inlined_call_operand.vmem [shape: f32[8,128], index: 5, kind: output, shape index: {}]
  %s6 = sld [smem:[#allocation0]]
  $region38: #{forward.1} parent=0
    _
  %s8 = ssub.s32 1, %s6
  %s9 = scalar_select 0, %s8, %s6
  $region1: #{forward.1} parent=0
    #allocation2 [shape = 'u8[131072]{0}', space=vmem, size = 0x20000, scoped, tag = 'input window, operand 1, single buffered']
    #allocation3 [shape = 's32[1]{0}', space=sflag, size = 0x4, scoped, tag = 'scoped memory for forward.1']
    #allocation4 [shape = 'u8[131072]{0}', space=vmem, size = 0x20000, scoped, tag = 'input window, operand 3, single buffered']
    #allocation5 [shape = 's32[1]{0}', space=sflag, size = 0x4, scoped, tag = 'scoped memory for forward.1']
    %10 = vsyncpa [#allocation3], 0
    %11 = vsyncpa [#allocation5], 0
    // Predicated region
    $region2: #{forward.1} parent=1 // pred_check
      _
    $region3: #{forward.1} parent=1 // pred_check_branch
      %13 = sbr.rel (0) target = $region5
    $region4: #{forward.1} parent=1 // pred_region
      _
    $region5: #{forward.1} parent=1 // pred_fallthru
      _
    // Predicated region
    $region6: #{forward.1} parent=1 // pred_check
      _
    $region7: #{forward.1} parent=1 // pred_check_branch
      %15 = sbr.rel (0) target = $region9
    $region8: #{forward.1} parent=1 // pred_region
      %s17 = ssub.s32 4096, 4096
      %18 = vsyncadd [#allocation3], %s17
      %s19 = sshll.u32 [#allocation2], 4
      %s20 = int_to_ptr.vmem [resolvable:$true] %s19
      %25 = dma.hbm_to_vmem [thread:$0]  %s1, 4096, %s20, [#allocation3], 256, 256, 16
    $region9: #{forward.1} parent=1 // pred_fallthru
      _
    // Predicated region
    $region10: #{forward.1} parent=1 // pred_check
      _
    $region11: #{forward.1} parent=1 // pred_check_branch
      %27 = sbr.rel (0) target = $region13
    $region12: #{forward.1} parent=1 // pred_region
      _
    $region13: #{forward.1} parent=1 // pred_fallthru
      _
    // Predicated region
    $region14: #{forward.1} parent=1 // pred_check
      _
    $region15: #{forward.1} parent=1 // pred_check_branch
      %29 = sbr.rel (0) target = $region17
    $region16: #{forward.1} parent=1 // pred_region
      %s31 = ssub.s32 4096, 4096
      %32 = vsyncadd [#allocation5], %s31
      %s33 = sshll.u32 [#allocation4], 4
      %s34 = int_to_ptr.vmem [resolvable:$true] %s33
      %39 = dma.hbm_to_vmem [thread:$0]  %s3, 4096, %s34, [#allocation5], 128, 128, 8
    $region17: #{forward.1} parent=1 // pred_fallthru
      _
    // Predicated region
    $region18: #{forward.1} parent=1 // pred_check
      _
    $region19: #{forward.1} parent=1 // pred_check_branch
      %41 = sbr.rel (0) target = $region21
    $region20: #{forward.1} parent=1 // pred_region
      _
    $region21: #{forward.1} parent=1 // pred_fallthru
      _
    // Predicated region
    $region22: #{forward.1} parent=1 // pred_check
      _
    $region23: #{forward.1} parent=1 // pred_check_branch
      %43 = sbr.rel (0) target = $region25
    $region24: #{forward.1} parent=1 // pred_region
      %44 = dma.done [#allocation3], 4096
    $region25: #{forward.1} parent=1 // pred_fallthru
      _
    // Predicated region
    $region26: #{forward.1} parent=1 // pred_check
      _
    $region27: #{forward.1} parent=1 // pred_check_branch
      %46 = sbr.rel (0) target = $region29
    $region28: #{forward.1} parent=1 // pred_region
      %47 = dma.done [#allocation5], 4096
    $region29: #{forward.1} parent=1 // pred_fallthru
      _
    %v48 = vld [vmem:[%s0] sm:$0xff]
    %v49 = vld [vmem:[#allocation2] sm:$0xff]
    %v50 = vld [vmem:[#allocation2 + $0x8] sm:$0xff]
    %v51 = vld [vmem:[#allocation2 + $0x10] sm:$0xff]
    %v52 = vld [vmem:[#allocation2 + $0x18] sm:$0xff]
    %v53 = vld [vmem:[#allocation2 + $0x20] sm:$0xff]
    %v54 = vld [vmem:[#allocation2 + $0x28] sm:$0xff]
    %v55 = vld [vmem:[#allocation2 + $0x30] sm:$0xff]
    %v56 = vld [vmem:[#allocation2 + $0x38] sm:$0xff]
    %v57 = vld [vmem:[#allocation2 + $0x40] sm:$0xff]
    %v58 = vld [vmem:[#allocation2 + $0x48] sm:$0xff]
    %v59 = vld [vmem:[#allocation2 + $0x50] sm:$0xff]
    %v60 = vld [vmem:[#allocation2 + $0x58] sm:$0xff]
    %v61 = vld [vmem:[#allocation2 + $0x60] sm:$0xff]
    %v62 = vld [vmem:[#allocation2 + $0x68] sm:$0xff]
    %v63 = vld [vmem:[#allocation2 + $0x70] sm:$0xff]
    %v64 = vld [vmem:[#allocation2 + $0x78] sm:$0xff]
    %v65 = vld [vmem:[#allocation2 + $0x80] sm:$0xff]
    %v66 = vld [vmem:[#allocation2 + $0x88] sm:$0xff]
    %v67 = vld [vmem:[#allocation2 + $0x90] sm:$0xff]
    %v68 = vld [vmem:[#allocation2 + $0x98] sm:$0xff]
    %v69 = vld [vmem:[#allocation2 + $0xa0] sm:$0xff]
    %v70 = vld [vmem:[#allocation2 + $0xa8] sm:$0xff]
    %v71 = vld [vmem:[#allocation2 + $0xb0] sm:$0xff]
    %v72 = vld [vmem:[#allocation2 + $0xb8] sm:$0xff]
    %v73 = vld [vmem:[#allocation2 + $0xc0] sm:$0xff]
    %v74 = vld [vmem:[#allocation2 + $0xc8] sm:$0xff]
    %v75 = vld [vmem:[#allocation2 + $0xd0] sm:$0xff]
    %v76 = vld [vmem:[#allocation2 + $0xd8] sm:$0xff]
    %v77 = vld [vmem:[#allocation2 + $0xe0] sm:$0xff]
    %v78 = vld [vmem:[#allocation2 + $0xe8] sm:$0xff]
    %v79 = vld [vmem:[#allocation2 + $0xf0] sm:$0xff]
    %v80 = vld [vmem:[#allocation2 + $0xf8] sm:$0xff]
    %v81 = vld [vmem:[%s2] sm:$0x3]
    %v83 = vlaneseq
    %v84 = vshrl.u32 %v83, 7
    %v85 = vsub.s32 0, %v84
    %v86 = vrot.slane %v81, %v85
    %v87 = vlaneseq
    %v88 = vshrl.u32 %v87, 7
    %v89 = vsub.s32 1, %v88
    %v90 = vrot.slane %v81, %v89
    %93 = vmatprep.subr.mxu0 %v50
    %94 = vmatpush1.msra.mxu0 %v49
    %95 = vmatprep.subr.mxu0 %v52
    %96 = vmatpush1.msra.mxu0 %v51
    %97 = vmatprep.subr.mxu0 %v54
    %98 = vmatpush1.msra.mxu0 %v53
    %99 = vmatprep.subr.mxu0 %v56
    %100 = vmatpush1.msra.mxu0 %v55
    %101 = vmatprep.subr.mxu0 %v58
    %102 = vmatpush1.msra.mxu0 %v57
    %103 = vmatprep.subr.mxu0 %v60
    %104 = vmatpush1.msra.mxu0 %v59
    %105 = vmatprep.subr.mxu0 %v62
    %106 = vmatpush1.msra.mxu0 %v61
    %107 = vmatprep.subr.mxu0 %v64
    %108 = vmatpush1.msra.mxu0 %v63
    %109 = vmatprep.subr.mxu0 %v66
    %110 = vmatpush1.msra.mxu0 %v65
    %111 = vmatprep.subr.mxu0 %v68
    %112 = vmatpush1.msra.mxu0 %v67
    %113 = vmatprep.subr.mxu0 %v70
    %114 = vmatpush1.msra.mxu0 %v69
    %115 = vmatprep.subr.mxu0 %v72
    %116 = vmatpush1.msra.mxu0 %v71
    %117 = vmatprep.subr.mxu0 %v74
    %118 = vmatpush1.msra.mxu0 %v73
    %119 = vmatprep.subr.mxu0 %v76
    %120 = vmatpush1.msra.mxu0 %v75
    %121 = vmatprep.subr.mxu0 %v78
    %122 = vmatpush1.msra.mxu0 %v77
    %123 = vmatprep.subr.mxu0 %v80
    %124 = vmatpush1.msra.mxu0 %v79
    %125 = vmatprep.subr.mxu0 0.0
    %126 = vmatpush1.msra.mxu0 0.0
    %127 = vmatprep.subr.mxu0 0.0
    %128 = vmatpush1.msra.mxu0 0.0
    %129 = vmatprep.subr.mxu0 0.0
    %130 = vmatpush1.msra.mxu0 0.0
    %131 = vmatprep.subr.mxu0 0.0
    %132 = vmatpush1.msra.mxu0 0.0
    %133 = vmatprep.subr.mxu0 0.0
    %134 = vmatpush1.msra.mxu0 0.0
    %135 = vmatprep.subr.mxu0 0.0
    %136 = vmatpush1.msra.mxu0 0.0
    %137 = vmatprep.subr.mxu0 0.0
    %138 = vmatpush1.msra.mxu0 0.0
    %139 = vmatprep.subr.mxu0 0.0
    %140 = vmatpush1.msra.mxu0 0.0
    %141 = vmatprep.subr.mxu0 0.0
    %142 = vmatpush1.msra.mxu0 0.0
    %143 = vmatprep.subr.mxu0 0.0
    %144 = vmatpush1.msra.mxu0 0.0
    %145 = vmatprep.subr.mxu0 0.0
    %146 = vmatpush1.msra.mxu0 0.0
    %147 = vmatprep.subr.mxu0 0.0
    %148 = vmatpush1.msra.mxu0 0.0
    %149 = vmatprep.subr.mxu0 0.0
    %150 = vmatpush1.msra.mxu0 0.0
    %151 = vmatprep.subr.mxu0 0.0
    %152 = vmatpush1.msra.mxu0 0.0
    %153 = vmatprep.subr.mxu0 0.0
    %154 = vmatpush1.msra.mxu0 0.0
    %155 = vmatprep.subr.mxu0 0.0
    %156 = vmatpush1.msra.mxu0 0.0
    %157 = vmatprep.mubr.f32.mxu0 0.0
    %158 = vmatmul.mubr.f32.gmra.mrb[0].mxu0 %v48
    %v159 = vpop.f32.mrb[0].mxu0
    %v160 = vadd.f32 %v86, %v159
    %v161 = vpop.f32.mrb[0].mxu0
    %v162 = vadd.f32 %v90, %v161
    %163 = vdwg.mxu0
    %v164 = vmax.f32 %v160, 0.0
    %v165 = vmax.f32 %v162, 0.0
    %v166 = vld [vmem:[#allocation4] sm:$0xff]
    %v167 = vld [vmem:[#allocation4 + $0x8] sm:$0xff]
    %v168 = vld [vmem:[#allocation4 + $0x10] sm:$0xff]
    %v169 = vld [vmem:[#allocation4 + $0x18] sm:$0xff]
    %v170 = vld [vmem:[#allocation4 + $0x20] sm:$0xff]
    %v171 = vld [vmem:[#allocation4 + $0x28] sm:$0xff]
    %v172 = vld [vmem:[#allocation4 + $0x30] sm:$0xff]
    %v173 = vld [vmem:[#allocation4 + $0x38] sm:$0xff]
    %v174 = vld [vmem:[#allocation4 + $0x40] sm:$0xff]
    %v175 = vld [vmem:[#allocation4 + $0x48] sm:$0xff]
    %v176 = vld [vmem:[#allocation4 + $0x50] sm:$0xff]
    %v177 = vld [vmem:[#allocation4 + $0x58] sm:$0xff]
    %v178 = vld [vmem:[#allocation4 + $0x60] sm:$0xff]
    %v179 = vld [vmem:[#allocation4 + $0x68] sm:$0xff]
    %v180 = vld [vmem:[#allocation4 + $0x70] sm:$0xff]
    %v181 = vld [vmem:[#allocation4 + $0x78] sm:$0xff]
    %v182 = vld [vmem:[#allocation4 + $0x80] sm:$0xff]
    %v183 = vld [vmem:[#allocation4 + $0x88] sm:$0xff]
    %v184 = vld [vmem:[#allocation4 + $0x90] sm:$0xff]
    %v185 = vld [vmem:[#allocation4 + $0x98] sm:$0xff]
    %v186 = vld [vmem:[#allocation4 + $0xa0] sm:$0xff]
    %v187 = vld [vmem:[#allocation4 + $0xa8] sm:$0xff]
    %v188 = vld [vmem:[#allocation4 + $0xb0] sm:$0xff]
    %v189 = vld [vmem:[#allocation4 + $0xb8] sm:$0xff]
    %v190 = vld [vmem:[#allocation4 + $0xc0] sm:$0xff]
    %v191 = vld [vmem:[#allocation4 + $0xc8] sm:$0xff]
    %v192 = vld [vmem:[#allocation4 + $0xd0] sm:$0xff]
    %v193 = vld [vmem:[#allocation4 + $0xd8] sm:$0xff]
    %v194 = vld [vmem:[#allocation4 + $0xe0] sm:$0xff]
    %v195 = vld [vmem:[#allocation4 + $0xe8] sm:$0xff]
    %v196 = vld [vmem:[#allocation4 + $0xf0] sm:$0xff]
    %v197 = vld [vmem:[#allocation4 + $0xf8] sm:$0xff]
    %v198 = vld [vmem:[%s4] sm:$0x1]
    %v200 = vlaneseq
    %v201 = vshrl.u32 %v200, 7
    %v202 = vsub.s32 0, %v201
    %v203 = vrot.slane %v198, %v202
    %205 = vmatprep.subr.mxu0 0.0
    %206 = vmatpush1.msra.mxu0 %v166
    %207 = vmatprep.subr.mxu0 0.0
    %208 = vmatpush1.msra.mxu0 %v167
    %209 = vmatprep.subr.mxu0 0.0
    %210 = vmatpush1.msra.mxu0 %v168
    %211 = vmatprep.subr.mxu0 0.0
    %212 = vmatpush1.msra.mxu0 %v169
    %213 = vmatprep.subr.mxu0 0.0
    %214 = vmatpush1.msra.mxu0 %v170
    %215 = vmatprep.subr.mxu0 0.0
    %216 = vmatpush1.msra.mxu0 %v171
    %217 = vmatprep.subr.mxu0 0.0
    %218 = vmatpush1.msra.mxu0 %v172
    %219 = vmatprep.subr.mxu0 0.0
    %220 = vmatpush1.msra.mxu0 %v173
    %221 = vmatprep.subr.mxu0 0.0
    %222 = vmatpush1.msra.mxu0 %v174
    %223 = vmatprep.subr.mxu0 0.0
    %224 = vmatpush1.msra.mxu0 %v175
    %225 = vmatprep.subr.mxu0 0.0
    %226 = vmatpush1.msra.mxu0 %v176
    %227 = vmatprep.subr.mxu0 0.0
    %228 = vmatpush1.msra.mxu0 %v177
    %229 = vmatprep.subr.mxu0 0.0
    %230 = vmatpush1.msra.mxu0 %v178
    %231 = vmatprep.subr.mxu0 0.0
    %232 = vmatpush1.msra.mxu0 %v179
    %233 = vmatprep.subr.mxu0 0.0
    %234 = vmatpush1.msra.mxu0 %v180
    %235 = vmatprep.subr.mxu0 0.0
    %236 = vmatpush1.msra.mxu0 %v181
    %237 = vmatprep.subr.mxu0 0.0
    %238 = vmatpush1.msra.mxu0 %v182
    %239 = vmatprep.subr.mxu0 0.0
    %240 = vmatpush1.msra.mxu0 %v183
    %241 = vmatprep.subr.mxu0 0.0
    %242 = vmatpush1.msra.mxu0 %v184
    %243 = vmatprep.subr.mxu0 0.0
    %244 = vmatpush1.msra.mxu0 %v185
    %245 = vmatprep.subr.mxu0 0.0
    %246 = vmatpush1.msra.mxu0 %v186
    %247 = vmatprep.subr.mxu0 0.0
    %248 = vmatpush1.msra.mxu0 %v187
    %249 = vmatprep.subr.mxu0 0.0
    %250 = vmatpush1.msra.mxu0 %v188
    %251 = vmatprep.subr.mxu0 0.0
    %252 = vmatpush1.msra.mxu0 %v189
    %253 = vmatprep.subr.mxu0 0.0
    %254 = vmatpush1.msra.mxu0 %v190
    %255 = vmatprep.subr.mxu0 0.0
    %256 = vmatpush1.msra.mxu0 %v191
    %257 = vmatprep.subr.mxu0 0.0
    %258 = vmatpush1.msra.mxu0 %v192
    %259 = vmatprep.subr.mxu0 0.0
    %260 = vmatpush1.msra.mxu0 %v193
    %261 = vmatprep.subr.mxu0 0.0
    %262 = vmatpush1.msra.mxu0 %v194
    %263 = vmatprep.subr.mxu0 0.0
    %264 = vmatpush1.msra.mxu0 %v195
    %265 = vmatprep.subr.mxu0 0.0
    %266 = vmatpush1.msra.mxu0 %v196
    %267 = vmatprep.subr.mxu0 0.0
    %268 = vmatpush1.msra.mxu0 %v197
    %269 = vmatprep.mubr.f32.mxu0 %v165
    %270 = vmatmul.mubr.f32.gmra.mrb[0].mxu0 %v164
    %v271 = vpop.f32.mrb[0].mxu0
    %v272 = vadd.f32 %v203, %v271
    %v273 = vpop.f32.mrb[0].mxu0
    %274 = vdwg.mxu0
    %v275 = vxor.u32 %v272, 2147483648
    %v276 = vmul.f32 %v275, 1.442695
    %v277 = vpow.pop %v276
    %v278 = vadd.f32 %v277, 1.0
    %v279 = vrcp.pop %v278
    %v280 = vmul.f32 1.0, %v279
    %281 = vst [vmem:[%s5] sm:$0xff] %v280
    // Predicated region
    $region30: #{forward.1} parent=1 // pred_check
      _
    $region31: #{forward.1} parent=1 // pred_check_branch
      %283 = sbr.rel (0) target = $region33
    $region32: #{forward.1} parent=1 // pred_region
      _
    $region33: #{forward.1} parent=1 // pred_fallthru
      _
    // Predicated region
    $region34: #{forward.1} parent=1 // pred_check
      _
    $region35: #{forward.1} parent=1 // pred_check_branch
      %285 = sbr.rel (0) target = $region37
    $region36: #{forward.1} parent=1 // pred_region
      _
    $region37: #{forward.1} parent=1 // pred_fallthru
      _
    %286 = vsyncpa [#allocation3], 1
    %287 = vsyncpa [#allocation5], 1

</llo_original>
